<compile_context>
chip_gen: v5e
topology: v5e:2x2
jax: 0.10.0
libtpu: 0.0.40
codegen_flags: <defaults>
</compile_context>

<pallas_src>
import math
import numpy as np
import jax
import jax.numpy as jnp
from jax.experimental import pallas as pl
from jax.experimental.pallas import tpu as pltpu


def semgconv_kernel(x_ref, w_ref, b_ref, o_ref):
    # x_ref: (TB, J*C_in)        lane-dense input slab
    # w_ref: (J*C_in, J*C_out)   adjacency-fused weight  diag(A)(x)W0 + offdiag(A)(x)W1
    # b_ref: (1, J*C_out)        bias tiled per (node, channel) column
    # o_ref: (TB, J*C_out)       lane-dense output slab
    acc = jnp.dot(x_ref[...], w_ref[...], preferred_element_type=jnp.float32)
    o_ref[...] = (acc + b_ref[...]).astype(o_ref.dtype)


def sem_graph_conv(x, w, adj_soft, bias, *, tb=None):
    """x: (B, J, C_in), w: (2, C_in, C_out), adj_soft: (J, J) row-softmaxed
    adjacency, bias: (C_out,).  Returns (B, J, C_out) float32."""
    B, J, C_in = x.shape
    C_out = w.shape[-1]
    jc_in, jc_out = J * C_in, J * C_out

    # ---- parameter-only precompute (plain XLA, batch independent) ----------
    eye = jnp.eye(J, dtype=jnp.float32)
    a_diag = adj_soft * eye
    a_off = adj_soft * (1.0 - eye)
    # Wbig[(j,c),(i,o)] = a_diag[i,j]*W0[c,o] + a_off[i,j]*W1[c,o]
    w_big = (jnp.einsum("ij,co->jcio", a_diag, w[0])
             + jnp.einsum("ij,co->jcio", a_off, w[1])).reshape(jc_in, jc_out)
    bias_row = jnp.tile(bias, (J,)).reshape(1, jc_out)

    # Lane-dense input slab (B, J*C_in): a free reshape of a contiguous array.
    x_flat = x.reshape(B, jc_in).astype(jnp.float32)

    # ---- batch tiling: ~512 MXU rows per grid step; pad B up to a multiple
    #      of the tile (no divisor search, no forced halving) ----------------
    if tb is None:
        tb = B if B <= 512 else 512
    tb = max(1, int(min(tb, B)))
    n_steps = -(-B // tb)
    b_pad = n_steps * tb
    if b_pad != B:
        x_flat = jnp.pad(x_flat, ((0, b_pad - B), (0, 0)))

    # Scoped-VMEM budget: x/out tiles double-buffered; invariant weight/bias
    # conservatively counted double-buffered as well.  Keep >= the 16 MiB v5e
    # default, cap at 32 MiB (safe on v5e/v6e/v7x physical VMEM).
    vmem_bytes = 4 * (2 * tb * (jc_in + jc_out) + 2 * (jc_in * jc_out + jc_out))
    vmem_limit = int(min(max(2 * vmem_bytes, 16 * 2**20), 32 * 2**20))

    # TODO(synk): for large real-model channel dims on v7x (64 MiB VMEM),
    # single-buffer the grid-invariant w_big/bias (pipeline_mode=pl.Buffered(1))
    # and stream x / w_big in bf16 (kernel is bandwidth-, not MXU-bound).
    out = pl.pallas_call(
        semgconv_kernel,
        out_shape=jax.ShapeDtypeStruct((b_pad, jc_out), jnp.float32),
        grid_spec=pltpu.PrefetchScalarGridSpec(
            num_scalar_prefetch=0,
            grid=(n_steps,),
            in_specs=[
                pl.BlockSpec((tb, jc_in), lambda b: (b, 0)),       # x slab tile
                pl.BlockSpec((jc_in, jc_out), lambda b: (0, 0)),   # fused weight
                pl.BlockSpec((1, jc_out), lambda b: (0, 0)),       # bias row
            ],
            out_specs=pl.BlockSpec((tb, jc_out), lambda b: (b, 0)),
        ),
        compiler_params=pltpu.CompilerParams(
            dimension_semantics=("parallel",),
            vmem_limit_bytes=vmem_limit),
    )(x_flat, w_big, bias_row)

    # Lane-dense slab -> (B, J, C_out) view; drop any batch padding.
    return out[:B].reshape(B, J, C_out)


def build_params(key, in_features, out_features, adj_np):
    """Deterministic parameter init mirroring SemGraphConv.__init__."""
    kw, kb = jax.random.split(key)

    # W: (2, in_features, out_features), xavier_uniform-style with gain=1.414
    fan_in = in_features * out_features
    fan_out = 2 * out_features
    bound = 1.414 * math.sqrt(6.0 / (fan_in + fan_out))
    W = jax.random.uniform(kw, (2, in_features, out_features),
                           minval=-bound, maxval=bound, dtype=jnp.float32)

    # e: one learned scalar per nonzero adjacency entry, init to 1
    mask = adj_np > 0
    rows, cols = np.nonzero(mask)
    e = jnp.ones((rows.shape[0],), dtype=jnp.float32)

    # bias: uniform(-stdv, stdv), stdv = 1/sqrt(out_features)
    stdv = 1.0 / math.sqrt(out_features)
    bias = jax.random.uniform(kb, (out_features,),
                              minval=-stdv, maxval=stdv, dtype=jnp.float32)

    # adj logits: -9e15 everywhere, e at mask positions; softmax over dim=1
    neg = jnp.full(adj_np.shape, -9000000000000000.0, dtype=jnp.float32)
    adj_logits = neg.at[(jnp.asarray(rows), jnp.asarray(cols))].set(e)
    adj_soft = jax.nn.softmax(adj_logits, axis=1)
    return W, bias, adj_soft


def reference(x, W, adj_soft, bias):
    """Faithful transcription of SemGraphConv.forward."""
    J = adj_soft.shape[0]
    eye = jnp.eye(J, dtype=jnp.float32)
    h0 = jnp.einsum("bjc,co->bjo", x, W[0])
    h1 = jnp.einsum("bjc,co->bjo", x, W[1])
    out = (jnp.einsum("ij,bjo->bio", adj_soft * eye, h0)
           + jnp.einsum("ij,bjo->bio", adj_soft * (1.0 - eye), h1))
    return out + bias.reshape(1, 1, -1)


if __name__ == "__main__":
    B, J, C_in, C_out = 2, 16, 16, 32

    # Deterministic synthetic adjacency: ring graph over J joints + self loops.
    adj_np = np.zeros((J, J), dtype=np.float32)
    for i in range(J):
        adj_np[i, i] = 1.0
        adj_np[i, (i + 1) % J] = 1.0
        adj_np[i, (i - 1) % J] = 1.0

    key = jax.random.PRNGKey(0)
    kx, kp = jax.random.split(key)
    x = jax.random.normal(kx, (B, J, C_in), dtype=jnp.float32)

    W, bias, adj_soft = build_params(kp, C_in, C_out, adj_np)

    out = sem_graph_conv(x, W, adj_soft, bias)
    out = jax.block_until_ready(out)

    ref = reference(x, W, adj_soft, bias)
    assert out.shape == (B, J, C_out)
    np.testing.assert_allclose(np.asarray(out), np.asarray(ref),
                               rtol=1e-4, atol=1e-5)

    print("KERNEL_OK")
</pallas_src>

<mosaic_0001>
module attributes {stable_mosaic.version = 11 : i64} {
  func.func @semgconv_kernel(%arg0: i32, %arg1: memref<2x256xf32, #tpu.memory_space<vmem>>, %arg2: memref<256x512xf32, #tpu.memory_space<vmem>>, %arg3: memref<1x512xf32, #tpu.memory_space<vmem>>, %arg4: memref<2x512xf32, #tpu.memory_space<vmem>>) attributes {dimension_semantics = [#tpu.dimension_semantics<parallel>], iteration_bounds = array<i64: 1>, scalar_prefetch = 0 : i64, scratch_operands = 0 : i64, tpu.core_type = #tpu.core_type<tc>, window_params = [{transform_indices = @transform_0, window_bounds = array<i64: 2, 256>}, {pipeline_mode = #tpu.pipeline_mode<synchronous>, transform_indices = @transform_1, window_bounds = array<i64: 256, 512>}, {pipeline_mode = #tpu.pipeline_mode<synchronous>, transform_indices = @transform_2, window_bounds = array<i64: 1, 512>}, {transform_indices = @transform_3, window_bounds = array<i64: 2, 512>}]} {
    %c0 = arith.constant 0 : index
    %c0_0 = arith.constant 0 : index
    %0 = vector.load %arg1[%c0, %c0_0] : memref<2x256xf32, #tpu.memory_space<vmem>>, vector<2x256xf32>
    %c0_1 = arith.constant 0 : index
    %c0_2 = arith.constant 0 : index
    %1 = vector.load %arg2[%c0_1, %c0_2] : memref<256x512xf32, #tpu.memory_space<vmem>>, vector<256x512xf32>
    %cst = arith.constant dense<0.000000e+00> : vector<2x512xf32>
    %2 = tpu.matmul %0, %1, %cst {dimension_numbers = #tpu.dot_dimension_numbers<[1], [0], [0], [1], [0, 0, 1, 1], [], []>} : vector<2x256xf32>, vector<256x512xf32>, vector<2x512xf32> -> vector<2x512xf32>
    %c0_3 = arith.constant 0 : index
    %c0_4 = arith.constant 0 : index
    %3 = vector.load %arg3[%c0_3, %c0_4] : memref<1x512xf32, #tpu.memory_space<vmem>>, vector<1x512xf32>
    %4 = vector.broadcast %3 : vector<1x512xf32> to vector<2x512xf32>
    %5 = arith.addf %2, %4 : vector<2x512xf32>
    %c0_5 = arith.constant 0 : index
    %c0_6 = arith.constant 0 : index
    %6 = vector.load %arg4[%c0_5, %c0_6] : memref<2x512xf32, #tpu.memory_space<vmem>>, vector<2x512xf32>
    tpu.vector_store %arg4[%c0_5, %c0_6], %5 {strides = array<i32>} : memref<2x512xf32, #tpu.memory_space<vmem>>, vector<2x512xf32>,
    return
  }
  func.func @transform_0(%arg0: i32) -> (i32, i32) {
    %c0_i32 = arith.constant 0 : i32
    %c0_i32_0 = arith.constant 0 : i32
    return %arg0, %c0_i32 : i32, i32
  }
  func.func @transform_1(%arg0: i32) -> (i32, i32) {
    %c0_i32 = arith.constant 0 : i32
    %c0_i32_0 = arith.constant 0 : i32
    %c0_i32_1 = arith.constant 0 : i32
    return %c0_i32, %c0_i32_0 : i32, i32
  }
  func.func @transform_2(%arg0: i32) -> (i32, i32) {
    %c0_i32 = arith.constant 0 : i32
    %c0_i32_0 = arith.constant 0 : i32
    %c0_i32_1 = arith.constant 0 : i32
    return %c0_i32, %c0_i32_0 : i32, i32
  }
  func.func @transform_3(%arg0: i32) -> (i32, i32) {
    %c0_i32 = arith.constant 0 : i32
    %c0_i32_0 = arith.constant 0 : i32
    return %arg0, %c0_i32 : i32, i32
  }
}

</mosaic_0001>

<llo_original>
// kernel: tpu_custom_call.1
$region0: #{tpu_custom_call.1}
  #allocation0 [shape = 'u32[]', space=smem, size = 0x4, offset = 0x4, fixed_abs, tag = 'smem constant byte address 0x4 - core index']
  #allocation1 [shape = 'u32[72,128]{1,0:T(1,128)}', space=vmem, size = 0x9000, scoped, tag = 'internal scratch']
  %s0 = inlined_call_operand.hbm [shape: f32[2,256], index: 0, kind: input, shape index: {}]
  %s1 = inlined_call_operand.hbm [shape: f32[256,512], index: 1, kind: input, shape index: {}]
  %s2 = inlined_call_operand.hbm [shape: f32[1,512], index: 2, kind: input, shape index: {}]
  %s3 = inlined_call_operand.hbm [shape: f32[2,512], index: 3, kind: output, shape index: {}]
  %s4 = sld [smem:[#allocation0]]
  $region34: #{tpu_custom_call.1} parent=0
    _
  %s6 = ssub.s32 1, %s4
  %s7 = scalar_select 0, %s6, %s4
  $region1: #{tpu_custom_call.1} parent=0
    #allocation2 [shape = 'u8[2048]{0}', space=vmem, size = 0x800, scoped, tag = 'input window, operand 0, single buffered']
    #allocation3 [shape = 's32[1]{0}', space=sflag, size = 0x4, scoped, tag = 'scoped memory for tpu_custom_call.1']
    #allocation4 [shape = 's32[1]{0}', space=sflag, size = 0x4, scoped, tag = 'scoped memory for tpu_custom_call.1']
    #allocation5 [shape = 'u8[524288]{0}', space=vmem, size = 0x80000, scoped, tag = 'input window, operand 1, single buffered']
    #allocation6 [shape = 's32[1]{0}', space=sflag, size = 0x4, scoped, tag = 'scoped memory for tpu_custom_call.1']
    #allocation7 [shape = 'u8[2048]{0}', space=vmem, size = 0x800, scoped, tag = 'input window, operand 2, single buffered']
    #allocation8 [shape = 'u8[4096]{0}', space=vmem, size = 0x1000, scoped, tag = 'output window, operand 0, single buffered']
    %8 = vsyncpa [#allocation3], 0
    %9 = vsyncpa [#allocation6], 0
    %10 = vsyncpa [#allocation4], 0
    // Predicated region
    $region2: #{tpu_custom_call.1} parent=1 // pred_check
      _
    $region3: #{tpu_custom_call.1} parent=1 // pred_check_branch
      %12 = sbr.rel (0) target = $region5
    $region4: #{tpu_custom_call.1} parent=1 // pred_region
      %14 = vsyncadd [#allocation3], 0
      %s16 = sshll.u32 %s0, 4
      %s17 = int_to_ptr.hbm [resolvable:$true] %s16
      %s18 = sshll.u32 [#allocation2], 4
      %s19 = int_to_ptr.vmem [resolvable:$true] %s18
      %21 = dma.hbm_to_vmem [thread:$0]  %s17, 64, %s19, [#allocation3]
    $region5: #{tpu_custom_call.1} parent=1 // pred_fallthru
      _
    // Predicated region
    $region6: #{tpu_custom_call.1} parent=1 // pred_check
      _
    $region7: #{tpu_custom_call.1} parent=1 // pred_check_branch
      %23 = sbr.rel (0) target = $region9
    $region8: #{tpu_custom_call.1} parent=1 // pred_region
      %25 = vsyncadd [#allocation6], 0
      %s26 = sshll.u32 %s1, 4
      %s27 = int_to_ptr.hbm [resolvable:$true] %s26
      %s28 = sshll.u32 [#allocation5], 4
      %s29 = int_to_ptr.vmem [resolvable:$true] %s28
      %34 = dma.hbm_to_vmem [thread:$0]  %s27, 16384, %s29, [#allocation6], 512, 512, 32
    $region9: #{tpu_custom_call.1} parent=1 // pred_fallthru
      _
    // Predicated region
    $region10: #{tpu_custom_call.1} parent=1 // pred_check
      _
    $region11: #{tpu_custom_call.1} parent=1 // pred_check_branch
      %36 = sbr.rel (0) target = $region13
    $region12: #{tpu_custom_call.1} parent=1 // pred_region
      %38 = vsyncadd [#allocation6], 0
      %s40 = sshll.u32 %s2, 4
      %s41 = int_to_ptr.hbm [resolvable:$true] %s40
      %s42 = sshll.u32 [#allocation7], 4
      %s43 = int_to_ptr.vmem [resolvable:$true] %s42
      %45 = dma.hbm_to_vmem [thread:$0]  %s41, 64, %s43, [#allocation6]
    $region13: #{tpu_custom_call.1} parent=1 // pred_fallthru
      _
    // Predicated region
    $region14: #{tpu_custom_call.1} parent=1 // pred_check
      _
    $region15: #{tpu_custom_call.1} parent=1 // pred_check_branch
      %47 = sbr.rel (0) target = $region17
    $region16: #{tpu_custom_call.1} parent=1 // pred_region
      %49 = dma.done [#allocation3], 64
    $region17: #{tpu_custom_call.1} parent=1 // pred_fallthru
      _
    // Predicated region
    $region18: #{tpu_custom_call.1} parent=1 // pred_check
      _
    $region19: #{tpu_custom_call.1} parent=1 // pred_check_branch
      %51 = sbr.rel (0) target = $region21
    $region20: #{tpu_custom_call.1} parent=1 // pred_region
      %53 = dma.done [#allocation6], 16384
    $region21: #{tpu_custom_call.1} parent=1 // pred_fallthru
      _
    // Predicated region
    $region22: #{tpu_custom_call.1} parent=1 // pred_check
      _
    $region23: #{tpu_custom_call.1} parent=1 // pred_check_branch
      %55 = sbr.rel (0) target = $region25
    $region24: #{tpu_custom_call.1} parent=1 // pred_region
      %57 = dma.done [#allocation6], 64
    $region25: #{tpu_custom_call.1} parent=1 // pred_fallthru
      _
    %v58 = vld [vmem:[#allocation2] sm:$0xf]
    %v59 = vld [vmem:[#allocation5] sm:$0xff]
    %v60 = vld [vmem:[#allocation5 + $0x8] sm:$0xff]
    %v61 = vld [vmem:[#allocation5 + $0x10] sm:$0xff]
    %v62 = vld [vmem:[#allocation5 + $0x18] sm:$0xff]
    %v63 = vld [vmem:[#allocation5 + $0x20] sm:$0xff]
    %v64 = vld [vmem:[#allocation5 + $0x28] sm:$0xff]
    %v65 = vld [vmem:[#allocation5 + $0x30] sm:$0xff]
    %v66 = vld [vmem:[#allocation5 + $0x38] sm:$0xff]
    %v67 = vld [vmem:[#allocation5 + $0x40] sm:$0xff]
    %v68 = vld [vmem:[#allocation5 + $0x48] sm:$0xff]
    %v69 = vld [vmem:[#allocation5 + $0x50] sm:$0xff]
    %v70 = vld [vmem:[#allocation5 + $0x58] sm:$0xff]
    %v71 = vld [vmem:[#allocation5 + $0x60] sm:$0xff]
    %v72 = vld [vmem:[#allocation5 + $0x68] sm:$0xff]
    %v73 = vld [vmem:[#allocation5 + $0x70] sm:$0xff]
    %v74 = vld [vmem:[#allocation5 + $0x78] sm:$0xff]
    %v75 = vld [vmem:[#allocation5 + $0x80] sm:$0xff]
    %v76 = vld [vmem:[#allocation5 + $0x88] sm:$0xff]
    %v77 = vld [vmem:[#allocation5 + $0x90] sm:$0xff]
    %v78 = vld [vmem:[#allocation5 + $0x98] sm:$0xff]
    %v79 = vld [vmem:[#allocation5 + $0xa0] sm:$0xff]
    %v80 = vld [vmem:[#allocation5 + $0xa8] sm:$0xff]
    %v81 = vld [vmem:[#allocation5 + $0xb0] sm:$0xff]
    %v82 = vld [vmem:[#allocation5 + $0xb8] sm:$0xff]
    %v83 = vld [vmem:[#allocation5 + $0xc0] sm:$0xff]
    %v84 = vld [vmem:[#allocation5 + $0xc8] sm:$0xff]
    %v85 = vld [vmem:[#allocation5 + $0xd0] sm:$0xff]
    %v86 = vld [vmem:[#allocation5 + $0xd8] sm:$0xff]
    %v87 = vld [vmem:[#allocation5 + $0xe0] sm:$0xff]
    %v88 = vld [vmem:[#allocation5 + $0xe8] sm:$0xff]
    %v89 = vld [vmem:[#allocation5 + $0xf0] sm:$0xff]
    %v90 = vld [vmem:[#allocation5 + $0xf8] sm:$0xff]
    %v91 = vld [vmem:[#allocation5 + $0x100] sm:$0xff]
    %v92 = vld [vmem:[#allocation5 + $0x108] sm:$0xff]
    %v93 = vld [vmem:[#allocation5 + $0x110] sm:$0xff]
    %v94 = vld [vmem:[#allocation5 + $0x118] sm:$0xff]
    %v95 = vld [vmem:[#allocation5 + $0x120] sm:$0xff]
    %v96 = vld [vmem:[#allocation5 + $0x128] sm:$0xff]
    %v97 = vld [vmem:[#allocation5 + $0x130] sm:$0xff]
    %v98 = vld [vmem:[#allocation5 + $0x138] sm:$0xff]
    %v99 = vld [vmem:[#allocation5 + $0x140] sm:$0xff]
    %v100 = vld [vmem:[#allocation5 + $0x148] sm:$0xff]
    %v101 = vld [vmem:[#allocation5 + $0x150] sm:$0xff]
    %v102 = vld [vmem:[#allocation5 + $0x158] sm:$0xff]
    %v103 = vld [vmem:[#allocation5 + $0x160] sm:$0xff]
    %v104 = vld [vmem:[#allocation5 + $0x168] sm:$0xff]
    %v105 = vld [vmem:[#allocation5 + $0x170] sm:$0xff]
    %v106 = vld [vmem:[#allocation5 + $0x178] sm:$0xff]
    %v107 = vld [vmem:[#allocation5 + $0x180] sm:$0xff]
    %v108 = vld [vmem:[#allocation5 + $0x188] sm:$0xff]
    %v109 = vld [vmem:[#allocation5 + $0x190] sm:$0xff]
    %v110 = vld [vmem:[#allocation5 + $0x198] sm:$0xff]
    %v111 = vld [vmem:[#allocation5 + $0x1a0] sm:$0xff]
    %v112 = vld [vmem:[#allocation5 + $0x1a8] sm:$0xff]
    %v113 = vld [vmem:[#allocation5 + $0x1b0] sm:$0xff]
    %v114 = vld [vmem:[#allocation5 + $0x1b8] sm:$0xff]
    %v115 = vld [vmem:[#allocation5 + $0x1c0] sm:$0xff]
    %v116 = vld [vmem:[#allocation5 + $0x1c8] sm:$0xff]
    %v117 = vld [vmem:[#allocation5 + $0x1d0] sm:$0xff]
    %v118 = vld [vmem:[#allocation5 + $0x1d8] sm:$0xff]
    %v119 = vld [vmem:[#allocation5 + $0x1e0] sm:$0xff]
    %v120 = vld [vmem:[#allocation5 + $0x1e8] sm:$0xff]
    %v121 = vld [vmem:[#allocation5 + $0x1f0] sm:$0xff]
    %v122 = vld [vmem:[#allocation5 + $0x1f8] sm:$0xff]
    %v123 = vld [vmem:[#allocation5 + $0x200] sm:$0xff]
    %v124 = vld [vmem:[#allocation5 + $0x208] sm:$0xff]
    %v125 = vld [vmem:[#allocation5 + $0x210] sm:$0xff]
    %v126 = vld [vmem:[#allocation5 + $0x218] sm:$0xff]
    %v127 = vld [vmem:[#allocation5 + $0x220] sm:$0xff]
    %v128 = vld [vmem:[#allocation5 + $0x228] sm:$0xff]
    %v129 = vld [vmem:[#allocation5 + $0x230] sm:$0xff]
    %v130 = vld [vmem:[#allocation5 + $0x238] sm:$0xff]
    %v131 = vld [vmem:[#allocation5 + $0x240] sm:$0xff]
    %v132 = vld [vmem:[#allocation5 + $0x248] sm:$0xff]
    %v133 = vld [vmem:[#allocation5 + $0x250] sm:$0xff]
    %v134 = vld [vmem:[#allocation5 + $0x258] sm:$0xff]
    %v135 = vld [vmem:[#allocation5 + $0x260] sm:$0xff]
    %v136 = vld [vmem:[#allocation5 + $0x268] sm:$0xff]
    %v137 = vld [vmem:[#allocation5 + $0x270] sm:$0xff]
    %v138 = vld [vmem:[#allocation5 + $0x278] sm:$0xff]
    %v139 = vld [vmem:[#allocation5 + $0x280] sm:$0xff]
    %v140 = vld [vmem:[#allocation5 + $0x288] sm:$0xff]
    %v141 = vld [vmem:[#allocation5 + $0x290] sm:$0xff]
    %v142 = vld [vmem:[#allocation5 + $0x298] sm:$0xff]
    %v143 = vld [vmem:[#allocation5 + $0x2a0] sm:$0xff]
    %v144 = vld [vmem:[#allocation5 + $0x2a8] sm:$0xff]
    %v145 = vld [vmem:[#allocation5 + $0x2b0] sm:$0xff]
    %v146 = vld [vmem:[#allocation5 + $0x2b8] sm:$0xff]
    %v147 = vld [vmem:[#allocation5 + $0x2c0] sm:$0xff]
    %v148 = vld [vmem:[#allocation5 + $0x2c8] sm:$0xff]
    %v149 = vld [vmem:[#allocation5 + $0x2d0] sm:$0xff]
    %v150 = vld [vmem:[#allocation5 + $0x2d8] sm:$0xff]
    %v151 = vld [vmem:[#allocation5 + $0x2e0] sm:$0xff]
    %v152 = vld [vmem:[#allocation5 + $0x2e8] sm:$0xff]
    %v153 = vld [vmem:[#allocation5 + $0x2f0] sm:$0xff]
    %v154 = vld [vmem:[#allocation5 + $0x2f8] sm:$0xff]
    %v155 = vld [vmem:[#allocation5 + $0x300] sm:$0xff]
    %v156 = vld [vmem:[#allocation5 + $0x308] sm:$0xff]
    %v157 = vld [vmem:[#allocation5 + $0x310] sm:$0xff]
    %v158 = vld [vmem:[#allocation5 + $0x318] sm:$0xff]
    %v159 = vld [vmem:[#allocation5 + $0x320] sm:$0xff]
    %v160 = vld [vmem:[#allocation5 + $0x328] sm:$0xff]
    %v161 = vld [vmem:[#allocation5 + $0x330] sm:$0xff]
    %v162 = vld [vmem:[#allocation5 + $0x338] sm:$0xff]
    %v163 = vld [vmem:[#allocation5 + $0x340] sm:$0xff]
    %v164 = vld [vmem:[#allocation5 + $0x348] sm:$0xff]
    %v165 = vld [vmem:[#allocation5 + $0x350] sm:$0xff]
    %v166 = vld [vmem:[#allocation5 + $0x358] sm:$0xff]
    %v167 = vld [vmem:[#allocation5 + $0x360] sm:$0xff]
    %v168 = vld [vmem:[#allocation5 + $0x368] sm:$0xff]
    %v169 = vld [vmem:[#allocation5 + $0x370] sm:$0xff]
    %v170 = vld [vmem:[#allocation5 + $0x378] sm:$0xff]
    %v171 = vld [vmem:[#allocation5 + $0x380] sm:$0xff]
    %v172 = vld [vmem:[#allocation5 + $0x388] sm:$0xff]
    %v173 = vld [vmem:[#allocation5 + $0x390] sm:$0xff]
    %v174 = vld [vmem:[#allocation5 + $0x398] sm:$0xff]
    %v175 = vld [vmem:[#allocation5 + $0x3a0] sm:$0xff]
    %v176 = vld [vmem:[#allocation5 + $0x3a8] sm:$0xff]
    %v177 = vld [vmem:[#allocation5 + $0x3b0] sm:$0xff]
    %v178 = vld [vmem:[#allocation5 + $0x3b8] sm:$0xff]
    %v179 = vld [vmem:[#allocation5 + $0x3c0] sm:$0xff]
    %v180 = vld [vmem:[#allocation5 + $0x3c8] sm:$0xff]
    %v181 = vld [vmem:[#allocation5 + $0x3d0] sm:$0xff]
    %v182 = vld [vmem:[#allocation5 + $0x3d8] sm:$0xff]
    %v183 = vld [vmem:[#allocation5 + $0x3e0] sm:$0xff]
    %v184 = vld [vmem:[#allocation5 + $0x3e8] sm:$0xff]
    %v185 = vld [vmem:[#allocation5 + $0x3f0] sm:$0xff]
    %v186 = vld [vmem:[#allocation5 + $0x3f8] sm:$0xff]
    %v187 = vld [vmem:[#allocation7] sm:$0xf]
    %v189 = vperm.slane %v187, 0
    %v190 = vperm.slane %v187, 1
    %v191 = vperm.slane %v187, 2
    %v192 = vperm.slane %v187, 3
    %198 = vst [vmem:[#allocation1] ss:$4 sm:$0xff] %v58
    %v199 = vld.sshfl [vmem:[#allocation1] sm:$0xff pattern:$0x73625140]
    %v200 = vld.sshfl [vmem:[#allocation1 + $0x8] sm:$0xff pattern:$0x73625140]
    %203 = vmatpush.msra.mxu0 %v119
    %204 = vmatpush.msra.mxu0 %v115
    %205 = vmatpush.msra.mxu0 %v111
    %206 = vmatpush.msra.mxu0 %v107
    %207 = vmatpush.msra.mxu0 %v103
    %208 = vmatpush.msra.mxu0 %v99
    %209 = vmatpush.msra.mxu0 %v95
    %210 = vmatpush.msra.mxu0 %v91
    %211 = vmatpush.msra.mxu0 %v87
    %212 = vmatpush.msra.mxu0 %v83
    %213 = vmatpush.msra.mxu0 %v79
    %214 = vmatpush.msra.mxu0 %v75
    %215 = vmatpush.msra.mxu0 %v71
    %216 = vmatpush.msra.mxu0 %v67
    %217 = vmatpush.msra.mxu0 %v63
    %218 = vmatpush.msra.mxu0 %v59
    %219 = vmatmul.f32.gmra.mxu0 %v199
    %v220 = vpop.f32.mrf.mxu0
    %v221 = vadd.f32 %v189, %v220
    %222 = vdwg.mxu0
    %223 = vmatpush.msra.mxu0 %v183
    %224 = vmatpush.msra.mxu0 %v179
    %225 = vmatpush.msra.mxu0 %v175
    %226 = vmatpush.msra.mxu0 %v171
    %227 = vmatpush.msra.mxu0 %v167
    %228 = vmatpush.msra.mxu0 %v163
    %229 = vmatpush.msra.mxu0 %v159
    %230 = vmatpush.msra.mxu0 %v155
    %231 = vmatpush.msra.mxu0 %v151
    %232 = vmatpush.msra.mxu0 %v147
    %233 = vmatpush.msra.mxu0 %v143
    %234 = vmatpush.msra.mxu0 %v139
    %235 = vmatpush.msra.mxu0 %v135
    %236 = vmatpush.msra.mxu0 %v131
    %237 = vmatpush.msra.mxu0 %v127
    %238 = vmatpush.msra.mxu0 %v123
    %239 = vmatmul.f32.gmra.mxu0 %v200
    %v240 = vpop.f32.mrf.mxu0
    %v241 = vadd.f32 %v221, %v240
    %242 = vdwg.mxu0
    %243 = vmatpush.msra.mxu0 %v120
    %244 = vmatpush.msra.mxu0 %v116
    %245 = vmatpush.msra.mxu0 %v112
    %246 = vmatpush.msra.mxu0 %v108
    %247 = vmatpush.msra.mxu0 %v104
    %248 = vmatpush.msra.mxu0 %v100
    %249 = vmatpush.msra.mxu0 %v96
    %250 = vmatpush.msra.mxu0 %v92
    %251 = vmatpush.msra.mxu0 %v88
    %252 = vmatpush.msra.mxu0 %v84
    %253 = vmatpush.msra.mxu0 %v80
    %254 = vmatpush.msra.mxu0 %v76
    %255 = vmatpush.msra.mxu0 %v72
    %256 = vmatpush.msra.mxu0 %v68
    %257 = vmatpush.msra.mxu0 %v64
    %258 = vmatpush.msra.mxu0 %v60
    %259 = vmatmul.f32.gmra.mxu0 %v199
    %v260 = vpop.f32.mrf.mxu0
    %v261 = vadd.f32 %v190, %v260
    %262 = vdwg.mxu0
    %263 = vmatpush.msra.mxu0 %v184
    %264 = vmatpush.msra.mxu0 %v180
    %265 = vmatpush.msra.mxu0 %v176
    %266 = vmatpush.msra.mxu0 %v172
    %267 = vmatpush.msra.mxu0 %v168
    %268 = vmatpush.msra.mxu0 %v164
    %269 = vmatpush.msra.mxu0 %v160
    %270 = vmatpush.msra.mxu0 %v156
    %271 = vmatpush.msra.mxu0 %v152
    %272 = vmatpush.msra.mxu0 %v148
    %273 = vmatpush.msra.mxu0 %v144
    %274 = vmatpush.msra.mxu0 %v140
    %275 = vmatpush.msra.mxu0 %v136
    %276 = vmatpush.msra.mxu0 %v132
    %277 = vmatpush.msra.mxu0 %v128
    %278 = vmatpush.msra.mxu0 %v124
    %279 = vmatmul.f32.gmra.mxu0 %v200
    %v280 = vpop.f32.mrf.mxu0
    %v281 = vadd.f32 %v261, %v280
    %282 = vdwg.mxu0
    %283 = vmatpush.msra.mxu0 %v121
    %284 = vmatpush.msra.mxu0 %v117
    %285 = vmatpush.msra.mxu0 %v113
    %286 = vmatpush.msra.mxu0 %v109
    %287 = vmatpush.msra.mxu0 %v105
    %288 = vmatpush.msra.mxu0 %v101
    %289 = vmatpush.msra.mxu0 %v97
    %290 = vmatpush.msra.mxu0 %v93
    %291 = vmatpush.msra.mxu0 %v89
    %292 = vmatpush.msra.mxu0 %v85
    %293 = vmatpush.msra.mxu0 %v81
    %294 = vmatpush.msra.mxu0 %v77
    %295 = vmatpush.msra.mxu0 %v73
    %296 = vmatpush.msra.mxu0 %v69
    %297 = vmatpush.msra.mxu0 %v65
    %298 = vmatpush.msra.mxu0 %v61
    %299 = vmatmul.f32.gmra.mxu0 %v199
    %v300 = vpop.f32.mrf.mxu0
    %v301 = vadd.f32 %v191, %v300
    %302 = vdwg.mxu0
    %303 = vmatpush.msra.mxu0 %v185
    %304 = vmatpush.msra.mxu0 %v181
    %305 = vmatpush.msra.mxu0 %v177
    %306 = vmatpush.msra.mxu0 %v173
    %307 = vmatpush.msra.mxu0 %v169
    %308 = vmatpush.msra.mxu0 %v165
    %309 = vmatpush.msra.mxu0 %v161
    %310 = vmatpush.msra.mxu0 %v157
    %311 = vmatpush.msra.mxu0 %v153
    %312 = vmatpush.msra.mxu0 %v149
    %313 = vmatpush.msra.mxu0 %v145
    %314 = vmatpush.msra.mxu0 %v141
    %315 = vmatpush.msra.mxu0 %v137
    %316 = vmatpush.msra.mxu0 %v133
    %317 = vmatpush.msra.mxu0 %v129
    %318 = vmatpush.msra.mxu0 %v125
    %319 = vmatmul.f32.gmra.mxu0 %v200
    %v320 = vpop.f32.mrf.mxu0
    %v321 = vadd.f32 %v301, %v320
    %322 = vdwg.mxu0
    %323 = vmatpush.msra.mxu0 %v122
    %324 = vmatpush.msra.mxu0 %v118
    %325 = vmatpush.msra.mxu0 %v114
    %326 = vmatpush.msra.mxu0 %v110
    %327 = vmatpush.msra.mxu0 %v106
    %328 = vmatpush.msra.mxu0 %v102
    %329 = vmatpush.msra.mxu0 %v98
    %330 = vmatpush.msra.mxu0 %v94
    %331 = vmatpush.msra.mxu0 %v90
    %332 = vmatpush.msra.mxu0 %v86
    %333 = vmatpush.msra.mxu0 %v82
    %334 = vmatpush.msra.mxu0 %v78
    %335 = vmatpush.msra.mxu0 %v74
    %336 = vmatpush.msra.mxu0 %v70
    %337 = vmatpush.msra.mxu0 %v66
    %338 = vmatpush.msra.mxu0 %v62
    %339 = vmatmul.f32.gmra.mxu0 %v199
    %v340 = vpop.f32.mrf.mxu0
    %v341 = vadd.f32 %v192, %v340
    %342 = vdwg.mxu0
    %343 = vmatpush.msra.mxu0 %v186
    %344 = vmatpush.msra.mxu0 %v182
    %345 = vmatpush.msra.mxu0 %v178
    %346 = vmatpush.msra.mxu0 %v174
    %347 = vmatpush.msra.mxu0 %v170
    %348 = vmatpush.msra.mxu0 %v166
    %349 = vmatpush.msra.mxu0 %v162
    %350 = vmatpush.msra.mxu0 %v158
    %351 = vmatpush.msra.mxu0 %v154
    %352 = vmatpush.msra.mxu0 %v150
    %353 = vmatpush.msra.mxu0 %v146
    %354 = vmatpush.msra.mxu0 %v142
    %355 = vmatpush.msra.mxu0 %v138
    %356 = vmatpush.msra.mxu0 %v134
    %357 = vmatpush.msra.mxu0 %v130
    %358 = vmatpush.msra.mxu0 %v126
    %359 = vmatmul.f32.gmra.mxu0 %v200
    %v360 = vpop.f32.mrf.mxu0
    %v361 = vadd.f32 %v341, %v360
    %362 = vdwg.mxu0
    %v367 = vrot.slane %v281, 6
    %v368 = vrot.slane %v321, 4
    %v369 = vrot.slane %v361, 2
    %vm370 = vcmask 1041408
    %v371 = vsel %vm370, %v241, %v367
    %vm372 = vcmask 1045508
    %v373 = vsel %vm372, %v368, %v369
    %vm374 = vcmask 1043456
    %v375 = vsel %vm374, %v371, %v373
    %377 = vst [vmem:[#allocation8] sm:$0xff] %v375
    // Predicated region
    $region26: #{tpu_custom_call.1} parent=1 // pred_check
      _
    $region27: #{tpu_custom_call.1} parent=1 // pred_check_branch
      %379 = sbr.rel (0) target = $region29
    $region28: #{tpu_custom_call.1} parent=1 // pred_region
      %381 = vsyncadd [#allocation4], 0
      %s383 = sshll.u32 [#allocation8], 4
      %s384 = int_to_ptr.vmem [resolvable:$true] %s383
      %s385 = sshll.u32 %s3, 4
      %s386 = int_to_ptr.hbm [resolvable:$true] %s385
      %388 = dma.vmem_to_hbm [thread:$0]  %s384, 128, %s386, [#allocation4]
    $region29: #{tpu_custom_call.1} parent=1 // pred_fallthru
      _
    // Predicated region
    $region30: #{tpu_custom_call.1} parent=1 // pred_check
      _
    $region31: #{tpu_custom_call.1} parent=1 // pred_check_branch
      %390 = sbr.rel (0) target = $region33
    $region32: #{tpu_custom_call.1} parent=1 // pred_region
      %392 = dma.done [#allocation4], 128
    $region33: #{tpu_custom_call.1} parent=1 // pred_fallthru
      _
    %393 = vsyncpa [#allocation3], 1
    %394 = vsyncpa [#allocation6], 1
    %395 = vsyncpa [#allocation4], 1

</llo_original>
